<compile_context>
chip_gen: v7x
topology: tpu7x:2x2x1
jax: 0.10.0
libtpu: 0.0.40
codegen_flags: <defaults>
</compile_context>

<pallas_src>
import numpy as np
import jax
import jax.numpy as jnp
from jax import lax
from jax.experimental import pallas as pl
from jax.experimental.pallas import tpu as pltpu

N_QUBITS = 3
N_FUZZY_MEM = 2
DEFUZZ_QUBITS = 3
DEFUZZ_LAYER = 2
N_RULES = N_FUZZY_MEM ** N_QUBITS  # 8
EPS_GN = 1e-5
EPS_BN = 1e-5
EPS_AMP = 1e-12   # numerical guard for the amplitude normalization

# Packed-parameter slab layout (rows of a (40, 128) f32 array)
ROW_W1 = 0     # rows 0..9  : centered W1 duplicated  (10, 6) in cols 0:6
ROW_B1 = 10    # row 10     : centered b1 duplicated  (1, 6)  in cols 0:6
ROW_M = 11     # row 11     : [m0 | m1]               (1, 6)  in cols 0:6
ROW_C = 12     # row 12     : -1/(2*theta^2)          (1, 6)  in cols 0:6
ROW_U = 13     # rows 13..20: [Re(U^T) | Im(U^T)]     (8, 16) in cols 0:16
ROW_SW2 = 21   # rows 21..28: signs @ W2              (8, 10) lane-padded
ROW_B2 = 29    # row 29     : b2                      (1, 10) lane-padded
ROW_SEL = 30   # rows 30..35: rule-selection matrix   (6, 24) in cols 0:24
P_ROWS, P_COLS = 40, 128


# ----------------------------------------------------------------------------
# Pallas kernel: entire forward pass, whole batch in VMEM, two inputs total.
# ----------------------------------------------------------------------------
def qfnn_kernel(x_ref, p_ref, o_ref):
    x = x_ref[...]                                                   # (B, 10)

    # Linear(10->3) with GroupNorm mean-centering folded in, duplicated to
    # width 6 so both fuzzy memories are served by one dot: (B,10)x(10,6).
    h6 = jnp.dot(x, p_ref[ROW_W1:ROW_W1 + 10, 0:6],
                 preferred_element_type=jnp.float32)
    h6 = h6 + p_ref[ROW_B1:ROW_B1 + 1, 0:6]                          # (B, 6)

    # GroupNorm(1, 3): mean is zero by construction; var over the 6 duplicated
    # columns equals the var over the 3 unique channels.
    var = jnp.mean(h6 * h6, axis=1, keepdims=True)
    hn6 = h6 * lax.rsqrt(var + EPS_GN)                               # (B, 6)

    # Fused Gaussian memberships for both fuzzy memories: one (B, 6) exp.
    dm = hn6 - p_ref[ROW_M:ROW_M + 1, 0:6]
    f = jnp.exp(p_ref[ROW_C:ROW_C + 1, 0:6] * dm * dm)               # (B, 6)

    # sqrt -> clamp(0.99999) -> RY(2*arcsin) -> P(|1>) == min(f+1e-16, 0.99999^2)
    p = jnp.minimum(f + 1e-16, 0.99999 ** 2)                         # (B, 6)

    # q_tnorm rule products (Toffoli AND chain == product of per-wire P(|1>)).
    # The per-rule memory selection is a constant 0/1 matrix in the slab:
    # one (B,6)x(6,24) dot, then the product of the three 8-wide slices.
    t = jnp.dot(p, p_ref[ROW_SEL:ROW_SEL + 6, 0:24],
                preferred_element_type=jnp.float32)                  # (B, 24)
    q = t[:, 0:8] * t[:, 8:16] * t[:, 16:24]                         # (B, 8)

    # BatchNorm1d(8), training mode (batch statistics, affine = identity).
    bmu = jnp.mean(q, axis=0, keepdims=True)
    bd = q - bmu
    bvar = jnp.mean(bd * bd, axis=0, keepdims=True)
    qn = bd * lax.rsqrt(bvar + EPS_BN)                               # (B, 8)

    # AmplitudeEmbedding(normalize=True): per-row L2 normalization.
    psi = qn * lax.rsqrt(jnp.sum(qn * qn, axis=1, keepdims=True) + EPS_AMP)

    # q_defuzz: one (B,8)x(8,16) dot against [Re(U^T) | Im(U^T)].
    s = jnp.dot(psi, p_ref[ROW_U:ROW_U + N_RULES, 0:16],
                preferred_element_type=jnp.float32)                  # (B, 16)
    sr = s[:, 0:8]
    si = s[:, 8:16]
    probs = sr * sr + si * si                                        # (B, 8)

    # PauliZ expvals + softmax_linear folded: out = probs @ (signs@W2) + b2,
    # one lane-dense (B,8)x(8,128) dot + bias row.
    out = jnp.dot(probs, p_ref[ROW_SW2:ROW_SW2 + N_RULES, :],
                  preferred_element_type=jnp.float32)
    out = out + p_ref[ROW_B2:ROW_B2 + 1, :]                          # (B, 128)
    o_ref[...] = out.astype(o_ref.dtype)


def qfnn_forward(x, params):
    B = x.shape[0]
    out = pl.pallas_call(
        qfnn_kernel,
        out_shape=jax.ShapeDtypeStruct((B, P_COLS), jnp.float32),
        in_specs=[pl.BlockSpec(memory_space=pltpu.MemorySpace.VMEM),
                  pl.BlockSpec(memory_space=pltpu.MemorySpace.VMEM)],
        out_specs=pl.BlockSpec(memory_space=pltpu.MemorySpace.VMEM),
    )(x, params)
    return out[:, :10]


# ----------------------------------------------------------------------------
# Glue: build the 8x8 unitary of the q_defuzz circuit (fixed weights) and the
# PauliZ sign matrix in plain numpy, then pack everything into one slab.
# PennyLane convention: wire 0 is the MSB of the computational-basis index.
# ----------------------------------------------------------------------------
def _kron_all(mats):
    out = mats[0]
    for m in mats[1:]:
        out = np.kron(out, m)
    return out


def _single(gate, wire, n=DEFUZZ_QUBITS):
    mats = [np.eye(2, dtype=np.complex128) for _ in range(n)]
    mats[wire] = gate
    return _kron_all(mats)


def _cnot(control, target, n=DEFUZZ_QUBITS):
    dim = 2 ** n
    U = np.zeros((dim, dim), dtype=np.complex128)
    for k in range(dim):
        cbit = (k >> (n - 1 - control)) & 1
        k2 = k ^ (1 << (n - 1 - target)) if cbit else k
        U[k2, k] = 1.0
    return U


def _rx(t):
    c, s = np.cos(t / 2.0), np.sin(t / 2.0)
    return np.array([[c, -1j * s], [-1j * s, c]], dtype=np.complex128)


def _rz(t):
    return np.array([[np.exp(-1j * t / 2.0), 0.0],
                     [0.0, np.exp(1j * t / 2.0)]], dtype=np.complex128)


def build_defuzz_unitary(weights):  # weights: (DEFUZZ_LAYER, 3*DEFUZZ_QUBITS)
    U = np.eye(2 ** DEFUZZ_QUBITS, dtype=np.complex128)
    for i in range(DEFUZZ_LAYER):
        for j in range(DEFUZZ_QUBITS - 1):
            U = _cnot(j, j + 1) @ U
        U = _cnot(DEFUZZ_QUBITS - 1, 0) @ U
        for j in range(DEFUZZ_QUBITS):
            U = _single(_rx(weights[i, 3 * j]), j) @ U
            U = _single(_rz(weights[i, 3 * j + 1]), j) @ U
            U = _single(_rx(weights[i, 3 * j + 2]), j) @ U
    return U


def build_pauliz_signs():
    n = DEFUZZ_QUBITS
    signs = np.zeros((2 ** n, n), dtype=np.float64)
    for k in range(2 ** n):
        for j in range(n):
            signs[k, j] = 1.0 - 2.0 * ((k >> (n - 1 - j)) & 1)
    return signs


def build_rule_selection():
    """(6, 24) 0/1 matrix: column 8*j+i selects memory bit_j(i) on wire j."""
    sel = np.zeros((2 * N_QUBITS, N_QUBITS * N_RULES), np.float64)
    for j in range(N_QUBITS):
        for i in range(N_RULES):
            bit = (i >> (N_QUBITS - 1 - j)) & 1
            sel[3 * bit + j, N_RULES * j + i] = 1.0
    return sel


def pack_params(w1, b1, m, theta, defuzz_w, w2, b2):
    """Pack all parameters / folded constants into one (40, 128) f32 slab."""
    w1 = np.asarray(w1, np.float64)            # (10, 3), used as x @ w1
    b1 = np.asarray(b1, np.float64).reshape(-1)
    m = np.asarray(m, np.float64)              # (3, 2)
    theta = np.asarray(theta, np.float64)      # (3, 2)
    w2 = np.asarray(w2, np.float64)            # (3, 10)
    b2 = np.asarray(b2, np.float64).reshape(-1)

    # Fold GroupNorm(1,3) mean-centering into the linear.
    w1c = w1 - w1.mean(axis=1, keepdims=True)  # == w1 @ (I - J/3)
    b1c = b1 - b1.mean()

    U = build_defuzz_unitary(np.asarray(defuzz_w, np.float64))
    ur_ui = np.concatenate([np.real(U).T, np.imag(U).T], axis=1)     # (8, 16)
    signs = build_pauliz_signs()                                     # (8, 3)
    sw2 = signs @ w2                                                 # (8, 10)
    sel = build_rule_selection()                                     # (6, 24)

    params = np.zeros((P_ROWS, P_COLS), np.float32)
    params[ROW_W1:ROW_W1 + 10, 0:3] = w1c
    params[ROW_W1:ROW_W1 + 10, 3:6] = w1c
    params[ROW_B1, 0:3] = b1c
    params[ROW_B1, 3:6] = b1c
    params[ROW_M, 0:3] = m[:, 0]
    params[ROW_M, 3:6] = m[:, 1]
    coef = -1.0 / (2.0 * theta ** 2)                                 # (3, 2)
    params[ROW_C, 0:3] = coef[:, 0]
    params[ROW_C, 3:6] = coef[:, 1]
    params[ROW_U:ROW_U + N_RULES, 0:16] = ur_ui
    params[ROW_SW2:ROW_SW2 + N_RULES, 0:10] = sw2
    params[ROW_B2, 0:10] = b2
    params[ROW_SEL:ROW_SEL + 2 * N_QUBITS, 0:N_QUBITS * N_RULES] = sel
    return jnp.asarray(params)


# ----------------------------------------------------------------------------
# Pure-JAX reference (faithful to the original module math) for sanity check.
# ----------------------------------------------------------------------------
def qfnn_reference(x, w1, b1, m, theta, urT, uiT, signs, w2, b2):
    h = x @ w1 + b1
    mu = jnp.mean(h, axis=1, keepdims=True)
    var = jnp.mean((h - mu) ** 2, axis=1, keepdims=True)
    h = (h - mu) / jnp.sqrt(var + EPS_GN)
    f0 = jnp.exp(-((h - m[:, 0]) ** 2) / (2.0 * theta[:, 0] ** 2))
    f1 = jnp.exp(-((h - m[:, 1]) ** 2) / (2.0 * theta[:, 1] ** 2))
    p0 = jnp.clip(jnp.sqrt(f0 + 1e-16), -0.99999, 0.99999) ** 2
    p1 = jnp.clip(jnp.sqrt(f1 + 1e-16), -0.99999, 0.99999) ** 2
    cols = []
    for i in range(N_RULES):
        prod = jnp.ones((x.shape[0],), jnp.float32)
        for j in range(N_QUBITS):
            bit = (i >> (N_QUBITS - 1 - j)) & 1
            prod = prod * (p1[:, j] if bit else p0[:, j])
        cols.append(prod)
    q = jnp.stack(cols, axis=1)
    bmu = jnp.mean(q, axis=0, keepdims=True)
    bvar = jnp.mean((q - bmu) ** 2, axis=0, keepdims=True)
    qn = (q - bmu) / jnp.sqrt(bvar + EPS_BN)
    psi = qn / jnp.sqrt(jnp.sum(qn * qn, axis=1, keepdims=True) + EPS_AMP)
    sr = psi @ urT
    si = psi @ uiT
    probs = sr * sr + si * si
    z = probs @ signs
    return z @ w2 + b2


if __name__ == "__main__":
    key = jax.random.PRNGKey(0)
    keys = jax.random.split(key, 6)
    B = 8

    # Input
    x = jax.random.normal(keys[0], (B, 10), jnp.float32)

    # Linear(10, 3): xavier_uniform weight (stored transposed), bias = 0.01
    bound1 = float(np.sqrt(6.0 / (10 + N_QUBITS)))
    w1 = jax.random.uniform(keys[1], (10, N_QUBITS), jnp.float32, -bound1, bound1)
    b1 = jnp.full((N_QUBITS,), 0.01, jnp.float32)

    # Fuzzy membership parameters m, theta ~ N(0, 1), shape (n_qubits, n_fuzzy_mem)
    m = jax.random.normal(keys[2], (N_QUBITS, N_FUZZY_MEM), jnp.float32)
    theta = jax.random.normal(keys[3], (N_QUBITS, N_FUZZY_MEM), jnp.float32)

    # softmax_linear Linear(3, 10): xavier_uniform (stored transposed), bias = 0.01
    bound2 = float(np.sqrt(6.0 / (N_QUBITS + 10)))
    w2 = jax.random.uniform(keys[4], (N_QUBITS, 10), jnp.float32, -bound2, bound2)
    b2 = jnp.full((10,), 0.01, jnp.float32)

    # defuzz TorchLayer weights ~ U(0, 2*pi), shape (2, 9); circuit is folded
    # into constants inside pack_params.
    defuzz_w = np.asarray(
        jax.random.uniform(keys[5], (DEFUZZ_LAYER, 3 * DEFUZZ_QUBITS),
                           jnp.float32, 0.0, 2.0 * np.pi))

    params = pack_params(np.asarray(w1), np.asarray(b1), np.asarray(m),
                         np.asarray(theta), defuzz_w, np.asarray(w2),
                         np.asarray(b2))

    out = jax.block_until_ready(qfnn_forward(x, params))

    # Reference with the un-folded constants.
    U = build_defuzz_unitary(np.asarray(defuzz_w, np.float64))
    urT = jnp.asarray(np.real(U).T, jnp.float32)
    uiT = jnp.asarray(np.imag(U).T, jnp.float32)
    signs = jnp.asarray(build_pauliz_signs(), jnp.float32)
    ref = jax.block_until_ready(
        qfnn_reference(x, w1, b1, m, theta, urT, uiT, signs, w2, b2))

    assert out.shape == (B, 10)
    assert np.all(np.isfinite(np.asarray(out)))
    np.testing.assert_allclose(np.asarray(out), np.asarray(ref),
                               rtol=2e-2, atol=2e-2)

    print("KERNEL_OK")
</pallas_src>

<mosaic_0001>
module attributes {stable_mosaic.version = 11 : i64} {
  func.func @qfnn_kernel(%arg0: memref<8x10xf32, #tpu.memory_space<vmem>>, %arg1: memref<40x128xf32, #tpu.memory_space<vmem>>, %arg2: memref<8x128xf32, #tpu.memory_space<vmem>>) attributes {dimension_semantics = [], scalar_prefetch = 0 : i64, scratch_operands = 0 : i64, tpu.core_type = #tpu.core_type<tc>} {
    %c0 = arith.constant 0 : index
    %c0_0 = arith.constant 0 : index
    %0 = vector.load %arg0[%c0, %c0_0] : memref<8x10xf32, #tpu.memory_space<vmem>>, vector<8x10xf32>
    %c0_1 = arith.constant 0 : index
    %c0_2 = arith.constant 0 : index
    %1 = vector.load %arg1[%c0_1, %c0_2] : memref<40x128xf32, #tpu.memory_space<vmem>>, vector<10x6xf32>
    %cst = arith.constant dense<0.000000e+00> : vector<8x6xf32>
    %2 = tpu.matmul %0, %1, %cst {dimension_numbers = #tpu.dot_dimension_numbers<[1], [0], [0], [1], [0, 0, 1, 1], [], []>} : vector<8x10xf32>, vector<10x6xf32>, vector<8x6xf32> -> vector<8x6xf32>
    %c10 = arith.constant 10 : index
    %c0_3 = arith.constant 0 : index
    %3 = vector.load %arg1[%c10, %c0_3] : memref<40x128xf32, #tpu.memory_space<vmem>>, vector<1x6xf32>
    %4 = vector.broadcast %3 : vector<1x6xf32> to vector<8x6xf32>
    %5 = arith.addf %2, %4 : vector<8x6xf32>
    %6 = arith.mulf %5, %5 : vector<8x6xf32>
    %cst_4 = arith.constant dense<0.000000e+00> : vector<8xf32>
    %7 = vector.multi_reduction <add>, %6, %cst_4 [1] : vector<8x6xf32> to vector<8xf32>
    %8 = vector.shape_cast %7 : vector<8xf32> to vector<8x1xf32>
    %cst_5 = arith.constant 6.000000e+00 : f32
    %9 = vector.broadcast %cst_5 : f32 to vector<8x1xf32>
    %10 = arith.divf %8, %9 : vector<8x1xf32>
    %cst_6 = arith.constant 9.99999974E-6 : f32
    %11 = vector.broadcast %cst_6 : f32 to vector<8x1xf32>
    %12 = arith.addf %10, %11 : vector<8x1xf32>
    %13 = math.rsqrt %12 : vector<8x1xf32>
    %14 = vector.broadcast %13 : vector<8x1xf32> to vector<8x6xf32>
    %15 = arith.mulf %5, %14 : vector<8x6xf32>
    %c11 = arith.constant 11 : index
    %c0_7 = arith.constant 0 : index
    %16 = vector.load %arg1[%c11, %c0_7] : memref<40x128xf32, #tpu.memory_space<vmem>>, vector<1x6xf32>
    %17 = vector.broadcast %16 : vector<1x6xf32> to vector<8x6xf32>
    %18 = arith.subf %15, %17 : vector<8x6xf32>
    %c12 = arith.constant 12 : index
    %c0_8 = arith.constant 0 : index
    %19 = vector.load %arg1[%c12, %c0_8] : memref<40x128xf32, #tpu.memory_space<vmem>>, vector<1x6xf32>
    %20 = vector.broadcast %19 : vector<1x6xf32> to vector<8x6xf32>
    %21 = arith.mulf %20, %18 : vector<8x6xf32>
    %22 = arith.mulf %21, %18 : vector<8x6xf32>
    %23 = math.exp %22 : vector<8x6xf32>
    %cst_9 = arith.constant 1.000000e-16 : f32
    %24 = vector.broadcast %cst_9 : f32 to vector<8x6xf32>
    %25 = arith.addf %23, %24 : vector<8x6xf32>
    %cst_10 = arith.constant 0.999979972 : f32
    %26 = vector.broadcast %cst_10 : f32 to vector<8x6xf32>
    %27 = arith.minimumf %25, %26 : vector<8x6xf32>
    %c30 = arith.constant 30 : index
    %c0_11 = arith.constant 0 : index
    %28 = vector.load %arg1[%c30, %c0_11] : memref<40x128xf32, #tpu.memory_space<vmem>>, vector<6x24xf32>
    %cst_12 = arith.constant dense<0.000000e+00> : vector<8x24xf32>
    %29 = tpu.matmul %27, %28, %cst_12 {dimension_numbers = #tpu.dot_dimension_numbers<[1], [0], [0], [1], [0, 0, 1, 1], [], []>} : vector<8x6xf32>, vector<6x24xf32>, vector<8x24xf32> -> vector<8x24xf32>
    %30 = vector.extract_strided_slice %29 {offsets = [0, 0], sizes = [8, 8], strides = [1, 1]} : vector<8x24xf32> to vector<8x8xf32>
    %31 = vector.extract_strided_slice %29 {offsets = [0, 8], sizes = [8, 8], strides = [1, 1]} : vector<8x24xf32> to vector<8x8xf32>
    %32 = arith.mulf %30, %31 : vector<8x8xf32>
    %33 = vector.extract_strided_slice %29 {offsets = [0, 16], sizes = [8, 8], strides = [1, 1]} : vector<8x24xf32> to vector<8x8xf32>
    %34 = arith.mulf %32, %33 : vector<8x8xf32>
    %cst_13 = arith.constant dense<0.000000e+00> : vector<8xf32>
    %35 = vector.multi_reduction <add>, %34, %cst_13 [0] : vector<8x8xf32> to vector<8xf32>
    %36 = vector.shape_cast %35 : vector<8xf32> to vector<1x8xf32>
    %cst_14 = arith.constant 8.000000e+00 : f32
    %37 = vector.broadcast %cst_14 : f32 to vector<1x8xf32>
    %38 = arith.divf %36, %37 : vector<1x8xf32>
    %39 = vector.broadcast %38 : vector<1x8xf32> to vector<8x8xf32>
    %40 = arith.subf %34, %39 : vector<8x8xf32>
    %41 = arith.mulf %40, %40 : vector<8x8xf32>
    %cst_15 = arith.constant dense<0.000000e+00> : vector<8xf32>
    %42 = vector.multi_reduction <add>, %41, %cst_15 [0] : vector<8x8xf32> to vector<8xf32>
    %43 = vector.shape_cast %42 : vector<8xf32> to vector<1x8xf32>
    %cst_16 = arith.constant 8.000000e+00 : f32
    %44 = vector.broadcast %cst_16 : f32 to vector<1x8xf32>
    %45 = arith.divf %43, %44 : vector<1x8xf32>
    %cst_17 = arith.constant 9.99999974E-6 : f32
    %46 = vector.broadcast %cst_17 : f32 to vector<1x8xf32>
    %47 = arith.addf %45, %46 : vector<1x8xf32>
    %48 = math.rsqrt %47 : vector<1x8xf32>
    %49 = vector.broadcast %48 : vector<1x8xf32> to vector<8x8xf32>
    %50 = arith.mulf %40, %49 : vector<8x8xf32>
    %51 = arith.mulf %50, %50 : vector<8x8xf32>
    %cst_18 = arith.constant dense<0.000000e+00> : vector<8xf32>
    %52 = vector.multi_reduction <add>, %51, %cst_18 [1] : vector<8x8xf32> to vector<8xf32>
    %53 = vector.shape_cast %52 : vector<8xf32> to vector<8x1xf32>
    %cst_19 = arith.constant 9.99999996E-13 : f32
    %54 = vector.broadcast %cst_19 : f32 to vector<8x1xf32>
    %55 = arith.addf %53, %54 : vector<8x1xf32>
    %56 = math.rsqrt %55 : vector<8x1xf32>
    %57 = vector.broadcast %56 : vector<8x1xf32> to vector<8x8xf32>
    %58 = arith.mulf %50, %57 : vector<8x8xf32>
    %c13 = arith.constant 13 : index
    %c0_20 = arith.constant 0 : index
    %59 = vector.load %arg1[%c13, %c0_20] : memref<40x128xf32, #tpu.memory_space<vmem>>, vector<8x16xf32>
    %cst_21 = arith.constant dense<0.000000e+00> : vector<8x16xf32>
    %60 = tpu.matmul %58, %59, %cst_21 {dimension_numbers = #tpu.dot_dimension_numbers<[1], [0], [0], [1], [0, 0, 1, 1], [], []>} : vector<8x8xf32>, vector<8x16xf32>, vector<8x16xf32> -> vector<8x16xf32>
    %61 = vector.extract_strided_slice %60 {offsets = [0, 0], sizes = [8, 8], strides = [1, 1]} : vector<8x16xf32> to vector<8x8xf32>
    %62 = vector.extract_strided_slice %60 {offsets = [0, 8], sizes = [8, 8], strides = [1, 1]} : vector<8x16xf32> to vector<8x8xf32>
    %63 = arith.mulf %61, %61 : vector<8x8xf32>
    %64 = arith.mulf %62, %62 : vector<8x8xf32>
    %65 = arith.addf %63, %64 : vector<8x8xf32>
    %c21 = arith.constant 21 : index
    %c0_22 = arith.constant 0 : index
    %66 = vector.load %arg1[%c21, %c0_22] : memref<40x128xf32, #tpu.memory_space<vmem>>, vector<8x128xf32>
    %cst_23 = arith.constant dense<0.000000e+00> : vector<8x128xf32>
    %67 = tpu.matmul %65, %66, %cst_23 {dimension_numbers = #tpu.dot_dimension_numbers<[1], [0], [0], [1], [0, 0, 1, 1], [], []>} : vector<8x8xf32>, vector<8x128xf32>, vector<8x128xf32> -> vector<8x128xf32>
    %c29 = arith.constant 29 : index
    %c0_24 = arith.constant 0 : index
    %68 = vector.load %arg1[%c29, %c0_24] : memref<40x128xf32, #tpu.memory_space<vmem>>, vector<1x128xf32>
    %69 = vector.broadcast %68 : vector<1x128xf32> to vector<8x128xf32>
    %70 = arith.addf %67, %69 : vector<8x128xf32>
    %c0_25 = arith.constant 0 : index
    %c0_26 = arith.constant 0 : index
    %71 = vector.load %arg2[%c0_25, %c0_26] : memref<8x128xf32, #tpu.memory_space<vmem>>, vector<8x128xf32>
    tpu.vector_store %arg2[%c0_25, %c0_26], %70 {strides = array<i32>} : memref<8x128xf32, #tpu.memory_space<vmem>>, vector<8x128xf32>,
    return
  }
}

</mosaic_0001>

<llo_original>
// kernel: tpu_custom_call.1
$region0: #{tpu_custom_call.1}
  #allocation0 [shape = 'u32[]', space=smem, size = 0x4, offset = 0x4, fixed_abs, tag = 'smem constant byte address 0x4 - core index']
  #allocation1 [shape = 'u32[144,128]{1,0:T(1,128)}', space=vmem, size = 0x12000, scoped, tag = 'internal scratch']
  %s0 = inlined_call_operand.hbm [shape: f32[8,10], index: 0, kind: input, shape index: {}]
  %s1 = inlined_call_operand.hbm [shape: f32[40,128], index: 1, kind: input, shape index: {}]
  %s2 = inlined_call_operand.hbm [shape: f32[8,128], index: 2, kind: output, shape index: {}]
  %s3 = sld [smem:[#allocation0]]
  $region26: #{tpu_custom_call.1} parent=0
    _
  %s5 = ssub.s32 1, %s3
  %s6 = scalar_select 0, %s5, %s3
  $region1: #{tpu_custom_call.1} parent=0
    #allocation2 [shape = 'u8[4096]{0}', space=vmem, size = 0x1000, scoped, tag = 'input window, operand 0, single buffered']
    #allocation3 [shape = 's32[1]{0}', space=sflag, size = 0x4, scoped, tag = 'scoped memory for tpu_custom_call.1']
    #allocation4 [shape = 's32[1]{0}', space=sflag, size = 0x4, scoped, tag = 'scoped memory for tpu_custom_call.1']
    #allocation5 [shape = 'u8[20480]{0}', space=vmem, size = 0x5000, scoped, tag = 'input window, operand 1, single buffered']
    #allocation6 [shape = 's32[1]{0}', space=sflag, size = 0x4, scoped, tag = 'scoped memory for tpu_custom_call.1']
    #allocation7 [shape = 'u8[4096]{0}', space=vmem, size = 0x1000, scoped, tag = 'output window, operand 0, single buffered']
    %7 = vsyncpa [#allocation3], 0
    %8 = vsyncpa [#allocation6], 0
    %9 = vsyncpa [#allocation4], 0
    // Predicated region
    $region2: #{tpu_custom_call.1} parent=1 // pred_check
      _
    $region3: #{tpu_custom_call.1} parent=1 // pred_check_branch
      %11 = sbr.rel (0) target = $region5
    $region4: #{tpu_custom_call.1} parent=1 // pred_region
      %s13 = ssub.s32 128, 128
      %14 = vsyncadd [#allocation3], %s13
      %s16 = sshll.u32 [#allocation2], 4
      %s17 = int_to_ptr.vmem [resolvable:$true] %s16
      %19 = dma.hbm_to_vmem [thread:$0]  %s0, 128, %s17, [#allocation3]
    $region5: #{tpu_custom_call.1} parent=1 // pred_fallthru
      _
    // Predicated region
    $region6: #{tpu_custom_call.1} parent=1 // pred_check
      _
    $region7: #{tpu_custom_call.1} parent=1 // pred_check_branch
      %21 = sbr.rel (0) target = $region9
    $region8: #{tpu_custom_call.1} parent=1 // pred_region
      %s23 = ssub.s32 640, 640
      %24 = vsyncadd [#allocation6], %s23
      %s25 = sshll.u32 [#allocation5], 4
      %s26 = int_to_ptr.vmem [resolvable:$true] %s25
      %31 = dma.hbm_to_vmem [thread:$0]  %s1, 640, %s26, [#allocation6], 128, 128, 8
    $region9: #{tpu_custom_call.1} parent=1 // pred_fallthru
      _
    // Predicated region
    $region10: #{tpu_custom_call.1} parent=1 // pred_check
      _
    $region11: #{tpu_custom_call.1} parent=1 // pred_check_branch
      %33 = sbr.rel (0) target = $region13
    $region12: #{tpu_custom_call.1} parent=1 // pred_region
      %34 = dma.done [#allocation3], 128
    $region13: #{tpu_custom_call.1} parent=1 // pred_fallthru
      _
    // Predicated region
    $region14: #{tpu_custom_call.1} parent=1 // pred_check
      _
    $region15: #{tpu_custom_call.1} parent=1 // pred_check_branch
      %36 = sbr.rel (0) target = $region17
    $region16: #{tpu_custom_call.1} parent=1 // pred_region
      %37 = dma.done [#allocation6], 640
    $region17: #{tpu_custom_call.1} parent=1 // pred_fallthru
      _
    %v38 = vld [vmem:[#allocation2] sm:$0xff]
    %v39 = vld [vmem:[#allocation5] sm:$0xff]
    %v40 = vld [vmem:[#allocation5 + $0x8] sm:$0x3]
    %v41 = vld [vmem:[#allocation5 + $0xa] sm:$0x1]
    %v42 = vlaneseq
    %v43 = vshrl.u32 %v42, 7
    %v44 = vsub.s32 0, %v43
    %v45 = vrot.slane %v41, %v44
    %vm46 = vcmask 80896
    %v48 = vsel %vm46, %v38, 0
    %vm50 = vcmask 1041408
    %v52 = vsel %vm50, %v40, 0
    %54 = vmatprep.subr.mxu0 0.0
    %55 = vmatpush1.msra.mxu0 %v39
    %56 = vmatprep.subr.mxu0 0.0
    %57 = vmatpush1.msra.mxu0 %v52
    %58 = vmatprep.subr.mxu0 0.0
    %59 = vmatpush1.msra.mxu0 0.0
    %60 = vmatprep.subr.mxu0 0.0
    %61 = vmatpush1.msra.mxu0 0.0
    %62 = vmatprep.subr.mxu0 0.0
    %63 = vmatpush1.msra.mxu0 0.0
    %64 = vmatprep.subr.mxu0 0.0
    %65 = vmatpush1.msra.mxu0 0.0
    %66 = vmatprep.subr.mxu0 0.0
    %67 = vmatpush1.msra.mxu0 0.0
    %68 = vmatprep.subr.mxu0 0.0
    %69 = vmatpush1.msra.mxu0 0.0
    %70 = vmatprep.subr.mxu0 0.0
    %71 = vmatpush1.msra.mxu0 0.0
    %72 = vmatprep.subr.mxu0 0.0
    %73 = vmatpush1.msra.mxu0 0.0
    %74 = vmatprep.subr.mxu0 0.0
    %75 = vmatpush1.msra.mxu0 0.0
    %76 = vmatprep.subr.mxu0 0.0
    %77 = vmatpush1.msra.mxu0 0.0
    %78 = vmatprep.subr.mxu0 0.0
    %79 = vmatpush1.msra.mxu0 0.0
    %80 = vmatprep.subr.mxu0 0.0
    %81 = vmatpush1.msra.mxu0 0.0
    %82 = vmatprep.subr.mxu0 0.0
    %83 = vmatpush1.msra.mxu0 0.0
    %84 = vmatprep.subr.mxu0 0.0
    %85 = vmatpush1.msra.mxu0 0.0
    %86 = vmatprep.subr.mxu0 0.0
    %87 = vmatpush1.msra.mxu0 0.0
    %88 = vmatprep.subr.mxu0 0.0
    %89 = vmatpush1.msra.mxu0 0.0
    %90 = vmatprep.subr.mxu0 0.0
    %91 = vmatpush1.msra.mxu0 0.0
    %92 = vmatprep.subr.mxu0 0.0
    %93 = vmatpush1.msra.mxu0 0.0
    %94 = vmatprep.subr.mxu0 0.0
    %95 = vmatpush1.msra.mxu0 0.0
    %96 = vmatprep.subr.mxu0 0.0
    %97 = vmatpush1.msra.mxu0 0.0
    %98 = vmatprep.subr.mxu0 0.0
    %99 = vmatpush1.msra.mxu0 0.0
    %100 = vmatprep.subr.mxu0 0.0
    %101 = vmatpush1.msra.mxu0 0.0
    %102 = vmatprep.subr.mxu0 0.0
    %103 = vmatpush1.msra.mxu0 0.0
    %104 = vmatprep.subr.mxu0 0.0
    %105 = vmatpush1.msra.mxu0 0.0
    %106 = vmatprep.subr.mxu0 0.0
    %107 = vmatpush1.msra.mxu0 0.0
    %108 = vmatprep.subr.mxu0 0.0
    %109 = vmatpush1.msra.mxu0 0.0
    %110 = vmatprep.subr.mxu0 0.0
    %111 = vmatpush1.msra.mxu0 0.0
    %112 = vmatprep.subr.mxu0 0.0
    %113 = vmatpush1.msra.mxu0 0.0
    %114 = vmatprep.subr.mxu0 0.0
    %115 = vmatpush1.msra.mxu0 0.0
    %116 = vmatprep.subr.mxu0 0.0
    %117 = vmatpush1.msra.mxu0 0.0
    %118 = vmatprep.mubr.f32.mxu0 0.0
    %119 = vmatmul.mubr.f32.gmra.mrb[0].mxu0 %v48
    %v120 = vpop.f32.mrb[0].mxu0
    %v121 = vadd.f32 %v45, %v120
    %v122 = vpop.f32.mrb[0].mxu0
    %123 = vdwg.mxu0
    %v124 = vmul.f32 %v121, %v121
    %vm125 = vcmask 48128
    %v126 = vsel %vm125, %v124, 0.0
    %127 = vadd.xlane.f32.xlu0 %v126
    %v128 = vpop.xlane.xlu0 %127
    %v129 = vrcp.pop 6.0
    %v130 = vmul.f32 %v128, %v129
    %v131 = vadd.f32 %v130, 1e-05
    %v132 = vrsqrt.pop %v131
    %v133 = vmul.f32 %v121, %v132
    %v134 = vld [vmem:[#allocation5 + $0xb] sm:$0x1]
    %v135 = vlaneseq
    %v136 = vshrl.u32 %v135, 7
    %v137 = vsub.s32 0, %v136
    %v138 = vrot.slane %v134, %v137
    %v139 = vsub.f32 %v133, %v138
    %v140 = vld [vmem:[#allocation5 + $0xc] sm:$0x1]
    %v141 = vlaneseq
    %v142 = vshrl.u32 %v141, 7
    %v143 = vsub.s32 0, %v142
    %v144 = vrot.slane %v140, %v143
    %v145 = vmul.f32 %v144, %v139
    %v146 = vmul.f32 %v145, %v139
    %v147 = vmul.f32 %v146, 1.442695
    %v148 = vpow.pop %v147
    %v149 = vadd.f32 %v148, 1e-16
    %v150 = vmin.f32 %v149, 0.99998
    %v151 = vld [vmem:[#allocation5 + $0x1e] sm:$0x3f]
    %v153 = vsel %vm125, %v150, 0
    %vm155 = vcmask 1045504
    %v157 = vsel %vm155, %v151, 0
    %159 = vmatprep.subr.mxu0 0.0
    %160 = vmatpush1.msra.mxu0 %v157
    %161 = vmatprep.subr.mxu0 0.0
    %162 = vmatpush1.msra.mxu0 0.0
    %163 = vmatprep.subr.mxu0 0.0
    %164 = vmatpush1.msra.mxu0 0.0
    %165 = vmatprep.subr.mxu0 0.0
    %166 = vmatpush1.msra.mxu0 0.0
    %167 = vmatprep.subr.mxu0 0.0
    %168 = vmatpush1.msra.mxu0 0.0
    %169 = vmatprep.subr.mxu0 0.0
    %170 = vmatpush1.msra.mxu0 0.0
    %171 = vmatprep.subr.mxu0 0.0
    %172 = vmatpush1.msra.mxu0 0.0
    %173 = vmatprep.subr.mxu0 0.0
    %174 = vmatpush1.msra.mxu0 0.0
    %175 = vmatprep.subr.mxu0 0.0
    %176 = vmatpush1.msra.mxu0 0.0
    %177 = vmatprep.subr.mxu0 0.0
    %178 = vmatpush1.msra.mxu0 0.0
    %179 = vmatprep.subr.mxu0 0.0
    %180 = vmatpush1.msra.mxu0 0.0
    %181 = vmatprep.subr.mxu0 0.0
    %182 = vmatpush1.msra.mxu0 0.0
    %183 = vmatprep.subr.mxu0 0.0
    %184 = vmatpush1.msra.mxu0 0.0
    %185 = vmatprep.subr.mxu0 0.0
    %186 = vmatpush1.msra.mxu0 0.0
    %187 = vmatprep.subr.mxu0 0.0
    %188 = vmatpush1.msra.mxu0 0.0
    %189 = vmatprep.subr.mxu0 0.0
    %190 = vmatpush1.msra.mxu0 0.0
    %191 = vmatprep.subr.mxu0 0.0
    %192 = vmatpush1.msra.mxu0 0.0
    %193 = vmatprep.subr.mxu0 0.0
    %194 = vmatpush1.msra.mxu0 0.0
    %195 = vmatprep.subr.mxu0 0.0
    %196 = vmatpush1.msra.mxu0 0.0
    %197 = vmatprep.subr.mxu0 0.0
    %198 = vmatpush1.msra.mxu0 0.0
    %199 = vmatprep.subr.mxu0 0.0
    %200 = vmatpush1.msra.mxu0 0.0
    %201 = vmatprep.subr.mxu0 0.0
    %202 = vmatpush1.msra.mxu0 0.0
    %203 = vmatprep.subr.mxu0 0.0
    %204 = vmatpush1.msra.mxu0 0.0
    %205 = vmatprep.subr.mxu0 0.0
    %206 = vmatpush1.msra.mxu0 0.0
    %207 = vmatprep.subr.mxu0 0.0
    %208 = vmatpush1.msra.mxu0 0.0
    %209 = vmatprep.subr.mxu0 0.0
    %210 = vmatpush1.msra.mxu0 0.0
    %211 = vmatprep.subr.mxu0 0.0
    %212 = vmatpush1.msra.mxu0 0.0
    %213 = vmatprep.subr.mxu0 0.0
    %214 = vmatpush1.msra.mxu0 0.0
    %215 = vmatprep.subr.mxu0 0.0
    %216 = vmatpush1.msra.mxu0 0.0
    %217 = vmatprep.subr.mxu0 0.0
    %218 = vmatpush1.msra.mxu0 0.0
    %219 = vmatprep.subr.mxu0 0.0
    %220 = vmatpush1.msra.mxu0 0.0
    %221 = vmatprep.subr.mxu0 0.0
    %222 = vmatpush1.msra.mxu0 0.0
    %223 = vmatprep.mubr.f32.mxu0 0.0
    %224 = vmatmul.mubr.f32.gmra.mrb[0].mxu0 %v153
    %v225 = vpop.f32.mrb[0].mxu0
    %v226 = vadd.f32 0.0, %v225
    %v227 = vpop.f32.mrb[0].mxu0
    %228 = vdwg.mxu0
    %230 = vrot.lane.b32.xlu0 %v226, 120
    %v231 = vpop.permute.xlu0 %230
    %v233 = vmul.f32 %v226, %v231
    %234 = vrot.lane.b32.xlu0 %v226, 112
    %v235 = vpop.permute.xlu0 %234
    %v237 = vmul.f32 %v233, %v235
    %vm238 = vcmask 64512
    %v239 = vsel %vm238, %v237, 0.0
    %v240 = vrot.slane %v239, 4
    %v241 = vadd.f32 %v239, %v240
    %v242 = vrot.slane %v241, 2
    %v243 = vadd.f32 %v241, %v242
    %v244 = vrot.slane %v243, 1
    %v245 = vadd.f32 %v243, %v244
    %v246 = vrcp.pop 8.0
    %v247 = vmul.f32 %v245, %v246
    %v248 = vsub.f32 %v237, %v247
    %v249 = vmul.f32 %v248, %v248
    %v250 = vsel %vm238, %v249, 0.0
    %v251 = vrot.slane %v250, 4
    %v252 = vadd.f32 %v250, %v251
    %v253 = vrot.slane %v252, 2
    %v254 = vadd.f32 %v252, %v253
    %v255 = vrot.slane %v254, 1
    %v256 = vadd.f32 %v254, %v255
    %v257 = vmul.f32 %v256, %v246
    %v258 = vadd.f32 %v257, 1e-05
    %v259 = vrsqrt.pop %v258
    %v260 = vmul.f32 %v248, %v259
    %v261 = vmul.f32 %v260, %v260
    %v262 = vsel %vm238, %v261, 0.0
    %263 = vadd.xlane.f32.xlu0 %v262
    %v264 = vpop.xlane.xlu0 %263
    %v265 = vadd.f32 %v264, 1e-12
    %v266 = vrsqrt.pop %v265
    %v267 = vmul.f32 %v260, %v266
    %v268 = vld [vmem:[#allocation5 + $0xd] sm:$0xff]
    %v270 = vsel %vm238, %v267, 0
    %272 = vmatprep.subr.mxu0 0.0
    %273 = vmatpush1.msra.mxu0 %v268
    %274 = vmatprep.subr.mxu0 0.0
    %275 = vmatpush1.msra.mxu0 0.0
    %276 = vmatprep.subr.mxu0 0.0
    %277 = vmatpush1.msra.mxu0 0.0
    %278 = vmatprep.subr.mxu0 0.0
    %279 = vmatpush1.msra.mxu0 0.0
    %280 = vmatprep.subr.mxu0 0.0
    %281 = vmatpush1.msra.mxu0 0.0
    %282 = vmatprep.subr.mxu0 0.0
    %283 = vmatpush1.msra.mxu0 0.0
    %284 = vmatprep.subr.mxu0 0.0
    %285 = vmatpush1.msra.mxu0 0.0
    %286 = vmatprep.subr.mxu0 0.0
    %287 = vmatpush1.msra.mxu0 0.0
    %288 = vmatprep.subr.mxu0 0.0
    %289 = vmatpush1.msra.mxu0 0.0
    %290 = vmatprep.subr.mxu0 0.0
    %291 = vmatpush1.msra.mxu0 0.0
    %292 = vmatprep.subr.mxu0 0.0
    %293 = vmatpush1.msra.mxu0 0.0
    %294 = vmatprep.subr.mxu0 0.0
    %295 = vmatpush1.msra.mxu0 0.0
    %296 = vmatprep.subr.mxu0 0.0
    %297 = vmatpush1.msra.mxu0 0.0
    %298 = vmatprep.subr.mxu0 0.0
    %299 = vmatpush1.msra.mxu0 0.0
    %300 = vmatprep.subr.mxu0 0.0
    %301 = vmatpush1.msra.mxu0 0.0
    %302 = vmatprep.subr.mxu0 0.0
    %303 = vmatpush1.msra.mxu0 0.0
    %304 = vmatprep.subr.mxu0 0.0
    %305 = vmatpush1.msra.mxu0 0.0
    %306 = vmatprep.subr.mxu0 0.0
    %307 = vmatpush1.msra.mxu0 0.0
    %308 = vmatprep.subr.mxu0 0.0
    %309 = vmatpush1.msra.mxu0 0.0
    %310 = vmatprep.subr.mxu0 0.0
    %311 = vmatpush1.msra.mxu0 0.0
    %312 = vmatprep.subr.mxu0 0.0
    %313 = vmatpush1.msra.mxu0 0.0
    %314 = vmatprep.subr.mxu0 0.0
    %315 = vmatpush1.msra.mxu0 0.0
    %316 = vmatprep.subr.mxu0 0.0
    %317 = vmatpush1.msra.mxu0 0.0
    %318 = vmatprep.subr.mxu0 0.0
    %319 = vmatpush1.msra.mxu0 0.0
    %320 = vmatprep.subr.mxu0 0.0
    %321 = vmatpush1.msra.mxu0 0.0
    %322 = vmatprep.subr.mxu0 0.0
    %323 = vmatpush1.msra.mxu0 0.0
    %324 = vmatprep.subr.mxu0 0.0
    %325 = vmatpush1.msra.mxu0 0.0
    %326 = vmatprep.subr.mxu0 0.0
    %327 = vmatpush1.msra.mxu0 0.0
    %328 = vmatprep.subr.mxu0 0.0
    %329 = vmatpush1.msra.mxu0 0.0
    %330 = vmatprep.subr.mxu0 0.0
    %331 = vmatpush1.msra.mxu0 0.0
    %332 = vmatprep.subr.mxu0 0.0
    %333 = vmatpush1.msra.mxu0 0.0
    %334 = vmatprep.subr.mxu0 0.0
    %335 = vmatpush1.msra.mxu0 0.0
    %336 = vmatprep.mubr.f32.mxu0 0.0
    %337 = vmatmul.mubr.f32.gmra.mrb[0].mxu0 %v270
    %v338 = vpop.f32.mrb[0].mxu0
    %v339 = vadd.f32 0.0, %v338
    %v340 = vpop.f32.mrb[0].mxu0
    %341 = vdwg.mxu0
    %v342 = vmul.f32 %v339, %v339
    %344 = vrot.lane.b32.xlu0 %v342, 120
    %v345 = vpop.permute.xlu0 %344
    %v347 = vadd.f32 %v342, %v345
    %v348 = vld [vmem:[#allocation5 + $0x15] sm:$0xff]
    %v349 = vld [vmem:[#allocation5 + $0x1d] sm:$0x1]
    %v350 = vlaneseq
    %v351 = vshrl.u32 %v350, 7
    %v352 = vsub.s32 0, %v351
    %v353 = vrot.slane %v349, %v352
    %v355 = vsel %vm238, %v347, 0
    %357 = vmatprep.subr.mxu0 0.0
    %358 = vmatpush1.msra.mxu0 %v348
    %359 = vmatprep.subr.mxu0 0.0
    %360 = vmatpush1.msra.mxu0 0.0
    %361 = vmatprep.subr.mxu0 0.0
    %362 = vmatpush1.msra.mxu0 0.0
    %363 = vmatprep.subr.mxu0 0.0
    %364 = vmatpush1.msra.mxu0 0.0
    %365 = vmatprep.subr.mxu0 0.0
    %366 = vmatpush1.msra.mxu0 0.0
    %367 = vmatprep.subr.mxu0 0.0
    %368 = vmatpush1.msra.mxu0 0.0
    %369 = vmatprep.subr.mxu0 0.0
    %370 = vmatpush1.msra.mxu0 0.0
    %371 = vmatprep.subr.mxu0 0.0
    %372 = vmatpush1.msra.mxu0 0.0
    %373 = vmatprep.subr.mxu0 0.0
    %374 = vmatpush1.msra.mxu0 0.0
    %375 = vmatprep.subr.mxu0 0.0
    %376 = vmatpush1.msra.mxu0 0.0
    %377 = vmatprep.subr.mxu0 0.0
    %378 = vmatpush1.msra.mxu0 0.0
    %379 = vmatprep.subr.mxu0 0.0
    %380 = vmatpush1.msra.mxu0 0.0
    %381 = vmatprep.subr.mxu0 0.0
    %382 = vmatpush1.msra.mxu0 0.0
    %383 = vmatprep.subr.mxu0 0.0
    %384 = vmatpush1.msra.mxu0 0.0
    %385 = vmatprep.subr.mxu0 0.0
    %386 = vmatpush1.msra.mxu0 0.0
    %387 = vmatprep.subr.mxu0 0.0
    %388 = vmatpush1.msra.mxu0 0.0
    %389 = vmatprep.subr.mxu0 0.0
    %390 = vmatpush1.msra.mxu0 0.0
    %391 = vmatprep.subr.mxu0 0.0
    %392 = vmatpush1.msra.mxu0 0.0
    %393 = vmatprep.subr.mxu0 0.0
    %394 = vmatpush1.msra.mxu0 0.0
    %395 = vmatprep.subr.mxu0 0.0
    %396 = vmatpush1.msra.mxu0 0.0
    %397 = vmatprep.subr.mxu0 0.0
    %398 = vmatpush1.msra.mxu0 0.0
    %399 = vmatprep.subr.mxu0 0.0
    %400 = vmatpush1.msra.mxu0 0.0
    %401 = vmatprep.subr.mxu0 0.0
    %402 = vmatpush1.msra.mxu0 0.0
    %403 = vmatprep.subr.mxu0 0.0
    %404 = vmatpush1.msra.mxu0 0.0
    %405 = vmatprep.subr.mxu0 0.0
    %406 = vmatpush1.msra.mxu0 0.0
    %407 = vmatprep.subr.mxu0 0.0
    %408 = vmatpush1.msra.mxu0 0.0
    %409 = vmatprep.subr.mxu0 0.0
    %410 = vmatpush1.msra.mxu0 0.0
    %411 = vmatprep.subr.mxu0 0.0
    %412 = vmatpush1.msra.mxu0 0.0
    %413 = vmatprep.subr.mxu0 0.0
    %414 = vmatpush1.msra.mxu0 0.0
    %415 = vmatprep.subr.mxu0 0.0
    %416 = vmatpush1.msra.mxu0 0.0
    %417 = vmatprep.subr.mxu0 0.0
    %418 = vmatpush1.msra.mxu0 0.0
    %419 = vmatprep.subr.mxu0 0.0
    %420 = vmatpush1.msra.mxu0 0.0
    %421 = vmatprep.mubr.f32.mxu0 0.0
    %422 = vmatmul.mubr.f32.gmra.mrb[0].mxu0 %v355
    %v423 = vpop.f32.mrb[0].mxu0
    %v424 = vadd.f32 %v353, %v423
    %v425 = vpop.f32.mrb[0].mxu0
    %426 = vdwg.mxu0
    %427 = vst [vmem:[#allocation7] sm:$0xff] %v424
    // Predicated region
    $region18: #{tpu_custom_call.1} parent=1 // pred_check
      _
    $region19: #{tpu_custom_call.1} parent=1 // pred_check_branch
      %429 = sbr.rel (0) target = $region21
    $region20: #{tpu_custom_call.1} parent=1 // pred_region
      %s431 = ssub.s32 128, 128
      %432 = vsyncadd [#allocation4], %s431
      %s434 = sshll.u32 [#allocation7], 4
      %s435 = int_to_ptr.vmem [resolvable:$true] %s434
      %437 = dma.vmem_to_hbm [thread:$0]  %s435, 128, %s2, [#allocation4]
    $region21: #{tpu_custom_call.1} parent=1 // pred_fallthru
      _
    // Predicated region
    $region22: #{tpu_custom_call.1} parent=1 // pred_check
      _
    $region23: #{tpu_custom_call.1} parent=1 // pred_check_branch
      %439 = sbr.rel (0) target = $region25
    $region24: #{tpu_custom_call.1} parent=1 // pred_region
      %440 = dma.done [#allocation4], 128
    $region25: #{tpu_custom_call.1} parent=1 // pred_fallthru
      _
    %441 = vsyncpa [#allocation3], 1
    %442 = vsyncpa [#allocation6], 1
    %443 = vsyncpa [#allocation4], 1

</llo_original>
